<compile_context>
chip_gen: v7x
topology: tpu7x:2x2x1
jax: 0.10.0
libtpu: 0.0.40
codegen_flags: <defaults>
</compile_context>

<pallas_src>
import jax
import jax.numpy as jnp
from jax.experimental import pallas as pl
from jax.experimental.pallas import tpu as pltpu


def _round_up(x, m):
    return ((x + m - 1) // m) * m


def qtl_matmul_kernel(x2_ref, w2_ref, o2_ref):
    # Single MXU-shaped real matmul; the complex structure is encoded in W2.
    o2_ref[...] = jnp.dot(x2_ref[...], w2_ref[...],
                          preferred_element_type=jnp.float32)


def fold_weights(quantum_tensor, hamiltonian, entanglement_matrix,
                 wave_function):
    """Fold the x-independent weight chain into one real (2D, 2D) matrix.

    Wc = (Q @ H @ E) * w[None, :]  and  W2 = [[Wr, Wi], [-Wi, Wr]].
    One-time O(D^3) cost; cache the result when weights are static.
    (If Q/H/E/w are trainable, re-run this fold per step so gradients flow.)
    """
    q = quantum_tensor.astype(jnp.complex64)
    h = hamiltonian.astype(jnp.complex64)
    e = entanglement_matrix.astype(jnp.complex64)
    w = wave_function.astype(jnp.complex64)
    qh = jnp.matmul(q, h, precision=jax.lax.Precision.HIGHEST)
    qhe = jnp.matmul(qh, e, precision=jax.lax.Precision.HIGHEST)
    wc = qhe * w[None, :]
    wr = jnp.real(wc).astype(jnp.float32)
    wi = jnp.imag(wc).astype(jnp.float32)
    top = jnp.concatenate([wr, wi], axis=1)
    bot = jnp.concatenate([-wi, wr], axis=1)
    return jnp.concatenate([top, bot], axis=0)          # (2D, 2D) float32


def quantum_tensor_apply(x, w2, *, max_tm=512):
    """y = x @ Wc using the folded real-block weight w2.  x: (M, D) complex."""
    M, D = x.shape
    assert w2.shape == (2 * D, 2 * D)

    xr = jnp.real(x).astype(jnp.float32)
    xi = jnp.imag(x).astype(jnp.float32)
    x2 = jnp.concatenate([xr, xi], axis=-1)             # (M, 2D) float32

    # Tile the batch; pad to a multiple of the tile instead of hard-asserting.
    m_pad8 = _round_up(max(M, 1), 8)
    tm = min(max_tm, m_pad8)
    m_padded = _round_up(M, tm)
    if m_padded != M:
        x2 = jnp.pad(x2, ((0, m_padded - M), (0, 0)))

    out2 = pl.pallas_call(
        qtl_matmul_kernel,
        out_shape=jax.ShapeDtypeStruct((m_padded, 2 * D), jnp.float32),
        grid_spec=pltpu.PrefetchScalarGridSpec(
            num_scalar_prefetch=0,
            grid=(m_padded // tm,),
            in_specs=[pl.BlockSpec((tm, 2 * D), lambda i: (i, 0)),
                      pl.BlockSpec((2 * D, 2 * D), lambda i: (0, 0))],
            out_specs=pl.BlockSpec((tm, 2 * D), lambda i: (i, 0)),
        ),
        compiler_params=pltpu.CompilerParams(
            dimension_semantics=("parallel",)),
    )(x2, w2)

    yr = out2[:M, :D]
    yi = out2[:M, D:]
    return jax.lax.complex(yr, yi)


def quantum_tensor_layer(x, quantum_tensor, hamiltonian, entanglement_matrix,
                         wave_function, *, max_tm=512):
    """Full forward matching QuantumTensorLayer.forward.

    The fold is recomputed here per call (correct if weights change / train);
    for static weights, call fold_weights() once and reuse with
    quantum_tensor_apply() to remove the per-call O(D^3) precompute.
    """
    w2 = fold_weights(quantum_tensor, hamiltonian, entanglement_matrix,
                      wave_function)
    return quantum_tensor_apply(x, w2, max_tm=max_tm)


def _randc(key, shape):
    kr, ki = jax.random.split(key)
    return jax.lax.complex(jax.random.normal(kr, shape, dtype=jnp.float32),
                           jax.random.normal(ki, shape, dtype=jnp.float32))


if __name__ == "__main__":
    # Small, TPU-friendly shapes consistent with the module: dimensions=128.
    D = 128
    M = 8

    key = jax.random.PRNGKey(0)
    k_x, k_q, k_h, k_e, k_w = jax.random.split(key, 5)

    x = _randc(k_x, (M, D))
    quantum_tensor = _randc(k_q, (D, D))
    hamiltonian = _randc(k_h, (D, D))
    entanglement_matrix = _randc(k_e, (D, D))
    wave_function = _randc(k_w, (D,))

    fn = jax.jit(quantum_tensor_layer)
    out = jax.block_until_ready(
        fn(x, quantum_tensor, hamiltonian, entanglement_matrix, wave_function))

    # Reference (pure JAX, complex64), same chain as the PyTorch forward.
    ref = ((x @ quantum_tensor) @ hamiltonian) @ entanglement_matrix
    ref = ref * wave_function[None, :]
    err = jnp.max(jnp.abs(out - ref)) / (jnp.max(jnp.abs(ref)) + 1e-12)
    assert out.shape == (M, D) and out.dtype == jnp.complex64
    assert float(err) < 1e-3, f"relative error too large: {float(err)}"

    # Batch that is not a multiple of 8 exercises the pad/unpad path
    # (no hard divisibility assert anymore).
    x_odd = _randc(jax.random.PRNGKey(1), (13, D))
    out_odd = jax.block_until_ready(
        fn(x_odd, quantum_tensor, hamiltonian, entanglement_matrix,
           wave_function))
    ref_odd = ((x_odd @ quantum_tensor) @ hamiltonian) @ entanglement_matrix
    ref_odd = ref_odd * wave_function[None, :]
    err_odd = (jnp.max(jnp.abs(out_odd - ref_odd))
               / (jnp.max(jnp.abs(ref_odd)) + 1e-12))
    assert out_odd.shape == (13, D)
    assert float(err_odd) < 1e-3, f"relative error too large: {float(err_odd)}"

    print("KERNEL_OK")
</pallas_src>

<mosaic_0001>
module attributes {stable_mosaic.version = 11 : i64} {
  func.func @qtl_matmul_kernel(%arg0: i32, %arg1: memref<8x256xf32, #tpu.memory_space<vmem>>, %arg2: memref<256x256xf32, #tpu.memory_space<vmem>>, %arg3: memref<8x256xf32, #tpu.memory_space<vmem>>) attributes {dimension_semantics = [#tpu.dimension_semantics<parallel>], iteration_bounds = array<i64: 1>, scalar_prefetch = 0 : i64, scratch_operands = 0 : i64, tpu.core_type = #tpu.core_type<tc>, window_params = [{transform_indices = @transform_0, window_bounds = array<i64: 8, 256>}, {pipeline_mode = #tpu.pipeline_mode<synchronous>, transform_indices = @transform_1, window_bounds = array<i64: 256, 256>}, {transform_indices = @transform_2, window_bounds = array<i64: 8, 256>}]} {
    %c0 = arith.constant 0 : index
    %c0_0 = arith.constant 0 : index
    %0 = vector.load %arg1[%c0, %c0_0] : memref<8x256xf32, #tpu.memory_space<vmem>>, vector<8x256xf32>
    %c0_1 = arith.constant 0 : index
    %c0_2 = arith.constant 0 : index
    %1 = vector.load %arg2[%c0_1, %c0_2] : memref<256x256xf32, #tpu.memory_space<vmem>>, vector<256x256xf32>
    %cst = arith.constant dense<0.000000e+00> : vector<8x256xf32>
    %2 = tpu.matmul %0, %1, %cst {dimension_numbers = #tpu.dot_dimension_numbers<[1], [0], [0], [1], [0, 0, 1, 1], [], []>} : vector<8x256xf32>, vector<256x256xf32>, vector<8x256xf32> -> vector<8x256xf32>
    %c0_3 = arith.constant 0 : index
    %c0_4 = arith.constant 0 : index
    %3 = vector.load %arg3[%c0_3, %c0_4] : memref<8x256xf32, #tpu.memory_space<vmem>>, vector<8x256xf32>
    tpu.vector_store %arg3[%c0_3, %c0_4], %2 {strides = array<i32>} : memref<8x256xf32, #tpu.memory_space<vmem>>, vector<8x256xf32>,
    return
  }
  func.func @transform_0(%arg0: i32) -> (i32, i32) {
    %c0_i32 = arith.constant 0 : i32
    %c0_i32_0 = arith.constant 0 : i32
    return %arg0, %c0_i32 : i32, i32
  }
  func.func @transform_1(%arg0: i32) -> (i32, i32) {
    %c0_i32 = arith.constant 0 : i32
    %c0_i32_0 = arith.constant 0 : i32
    %c0_i32_1 = arith.constant 0 : i32
    return %c0_i32, %c0_i32_0 : i32, i32
  }
  func.func @transform_2(%arg0: i32) -> (i32, i32) {
    %c0_i32 = arith.constant 0 : i32
    %c0_i32_0 = arith.constant 0 : i32
    return %arg0, %c0_i32 : i32, i32
  }
}

</mosaic_0001>

<llo_original>
// kernel: custom-call.4
$region0: #{custom-call.4}
  %s0 = inlined_call_operand.hbm [shape: c64[128,128], index: 0, kind: input, shape index: {}]
  %s1 = inlined_call_operand.vmem [shape: f32[128,128], index: 1, kind: output, shape index: {}]
  $region1: #{custom-call.4} parent=0
    #allocation0 [shape = 's32[1]{0}', space=sflag, size = 0x4, scoped, tag = 'scoped memory for custom-call.4']
    %2 = vsyncpa [#allocation0], 0
    %s3 = sshll.u32 %s1, 4
    %s4 = int_to_ptr.vmem [resolvable:$true] %s3
    %6 = dma.hbm_to_vmem [thread:$0]  %s0, 2048, %s4, [#allocation0]
    %7 = dma.done [#allocation0], 2048
    %8 = vsyncpa [#allocation0], 1

// kernel: custom-call.3
$region0: #{custom-call.3}
  %s0 = inlined_call_operand.hbm [shape: c64[128,128], index: 0, kind: input, shape index: {}]
  %s1 = inlined_call_operand.vmem [shape: f32[128,128], index: 1, kind: output, shape index: {}]
  %s2 = scalar_lea.hbm %s0, 2048
  $region1: #{custom-call.3} parent=0
    #allocation0 [shape = 's32[1]{0}', space=sflag, size = 0x4, scoped, tag = 'scoped memory for custom-call.3']
    %3 = vsyncpa [#allocation0], 0
    %s4 = sshll.u32 %s1, 4
    %s5 = int_to_ptr.vmem [resolvable:$true] %s4
    %7 = dma.hbm_to_vmem [thread:$0]  %s2, 2048, %s5, [#allocation0]
    %8 = dma.done [#allocation0], 2048
    %9 = vsyncpa [#allocation0], 1

// kernel: custom-call.8
$region0: #{custom-call.8}
  %s0 = inlined_call_operand.hbm [shape: c64[128], index: 0, kind: input, shape index: {}]
  %s1 = inlined_call_operand.vmem [shape: f32[128], index: 1, kind: output, shape index: {}]
  $region1: #{custom-call.8} parent=0
    #allocation0 [shape = 's32[1]{0}', space=sflag, size = 0x4, scoped, tag = 'scoped memory for custom-call.8']
    %2 = vsyncpa [#allocation0], 0
    %s3 = sshll.u32 %s1, 4
    %s4 = int_to_ptr.vmem [resolvable:$true] %s3
    %6 = dma.hbm_to_vmem [thread:$0]  %s0, 16, %s4, [#allocation0]
    %7 = dma.done [#allocation0], 16
    %8 = vsyncpa [#allocation0], 1

// kernel: custom-call.9
$region0: #{custom-call.9}
  %s0 = inlined_call_operand.hbm [shape: c64[128], index: 0, kind: input, shape index: {}]
  %s1 = inlined_call_operand.vmem [shape: f32[128], index: 1, kind: output, shape index: {}]
  %s2 = scalar_lea.hbm %s0, 16
  $region1: #{custom-call.9} parent=0
    #allocation0 [shape = 's32[1]{0}', space=sflag, size = 0x4, scoped, tag = 'scoped memory for custom-call.9']
    %3 = vsyncpa [#allocation0], 0
    %s4 = sshll.u32 %s1, 4
    %s5 = int_to_ptr.vmem [resolvable:$true] %s4
    %7 = dma.hbm_to_vmem [thread:$0]  %s2, 16, %s5, [#allocation0]
    %8 = dma.done [#allocation0], 16
    %9 = vsyncpa [#allocation0], 1

// kernel: custom-call
$region0: #{custom-call}
  %s0 = inlined_call_operand.hbm [shape: c64[8,128], index: 0, kind: input, shape index: {}]
  %s1 = inlined_call_operand.vmem [shape: f32[8,128], index: 1, kind: output, shape index: {}]
  $region1: #{custom-call} parent=0
    #allocation0 [shape = 's32[1]{0}', space=sflag, size = 0x4, scoped, tag = 'scoped memory for custom-call']
    %2 = vsyncpa [#allocation0], 0
    %s3 = sshll.u32 %s1, 4
    %s4 = int_to_ptr.vmem [resolvable:$true] %s3
    %6 = dma.hbm_to_vmem [thread:$0]  %s0, 128, %s4, [#allocation0]
    %7 = dma.done [#allocation0], 128
    %8 = vsyncpa [#allocation0], 1

// kernel: custom-call.1
$region0: #{custom-call.1}
  %s0 = inlined_call_operand.hbm [shape: c64[8,128], index: 0, kind: input, shape index: {}]
  %s1 = inlined_call_operand.vmem [shape: f32[8,128], index: 1, kind: output, shape index: {}]
  %s2 = scalar_lea.hbm %s0, 128
  $region1: #{custom-call.1} parent=0
    #allocation0 [shape = 's32[1]{0}', space=sflag, size = 0x4, scoped, tag = 'scoped memory for custom-call.1']
    %3 = vsyncpa [#allocation0], 0
    %s4 = sshll.u32 %s1, 4
    %s5 = int_to_ptr.vmem [resolvable:$true] %s4
    %7 = dma.hbm_to_vmem [thread:$0]  %s2, 128, %s5, [#allocation0]
    %8 = dma.done [#allocation0], 128
    %9 = vsyncpa [#allocation0], 1

// kernel: custom-call.10
$region0: #{custom-call.10}
  %s0 = inlined_call_operand.vmem [shape: f32[8,128], index: 0, kind: input, shape index: {}]
  %s1 = inlined_call_operand.vmem [shape: f32[8,128], index: 1, kind: input, shape index: {}]
  %s2 = inlined_call_operand.hbm [shape: c64[8,128], index: 2, kind: output, shape index: {}]
  %s3 = scalar_lea.hbm %s2, 128
  $region1: #{custom-call.10} parent=0
    #allocation0 [shape = 's32[1]{0}', space=sflag, size = 0x4, scoped, tag = 'scoped memory for custom-call.10']
    %4 = vsyncpa [#allocation0], 0
    %s5 = sshll.u32 %s0, 4
    %s6 = int_to_ptr.vmem [resolvable:$true] %s5
    %8 = dma.vmem_to_hbm [thread:$0]  %s6, 128, %s2, [#allocation0]
    %9 = dma.done [#allocation0], 128
    %10 = vsyncpa [#allocation0], 1
  $region2: #{custom-call.10} parent=0
    #allocation1 [shape = 's32[1]{0}', space=sflag, size = 0x4, scoped, tag = 'scoped memory for custom-call.10']
    %11 = vsyncpa [#allocation1], 0
    %s12 = sshll.u32 %s1, 4
    %s13 = int_to_ptr.vmem [resolvable:$true] %s12
    %15 = dma.vmem_to_hbm [thread:$0]  %s13, 128, %s3, [#allocation1]
    %16 = dma.done [#allocation1], 128
    %17 = vsyncpa [#allocation1], 1

// kernel: quantum_tensor_layer.1
$region0: #{quantum_tensor_layer.1}
  #allocation0 [shape = 'u32[]', space=smem, size = 0x4, offset = 0x4, fixed_abs, tag = 'smem constant byte address 0x4 - core index']
  #allocation1 [shape = 'u32[144,128]{1,0:T(1,128)}', space=vmem, size = 0x12000, scoped, tag = 'internal scratch']
  %s0 = inlined_call_operand.vmem [shape: f32[8,256], index: 0, kind: input, shape index: {}]
  %s1 = inlined_call_operand.vmem [shape: f32[256,256], index: 1, kind: input, shape index: {}]
  %s2 = inlined_call_operand.vmem [shape: f32[8,256], index: 2, kind: output, shape index: {}]
  %s3 = sld [smem:[#allocation0]]
  $region18: #{quantum_tensor_layer.1} parent=0
    _
  %s5 = ssub.s32 1, %s3
  %s6 = scalar_select 0, %s5, %s3
  // Predicated region
  $region2: #{quantum_tensor_layer.1} parent=0 // pred_check
    _
  $region3: #{quantum_tensor_layer.1} parent=0 // pred_check_branch
    %8 = sbr.rel (0) target = $region5
  $region4: #{quantum_tensor_layer.1} parent=0 // pred_region
    _
  $region5: #{quantum_tensor_layer.1} parent=0 // pred_fallthru
    _
  // Predicated region
  $region6: #{quantum_tensor_layer.1} parent=0 // pred_check
    _
  $region7: #{quantum_tensor_layer.1} parent=0 // pred_check_branch
    %10 = sbr.rel (0) target = $region9
  $region8: #{quantum_tensor_layer.1} parent=0 // pred_region
    _
  $region9: #{quantum_tensor_layer.1} parent=0 // pred_fallthru
    _
  %v11 = vld [vmem:[%s0] sm:$0xff]
  %v12 = vld [vmem:[%s0 + $0x8] sm:$0xff]
  %v13 = vld [vmem:[%s1] sm:$0xff]
  %v14 = vld [vmem:[%s1 + $0x8] sm:$0xff]
  %v15 = vld [vmem:[%s1 + $0x10] sm:$0xff]
  %v16 = vld [vmem:[%s1 + $0x18] sm:$0xff]
  %v17 = vld [vmem:[%s1 + $0x20] sm:$0xff]
  %v18 = vld [vmem:[%s1 + $0x28] sm:$0xff]
  %v19 = vld [vmem:[%s1 + $0x30] sm:$0xff]
  %v20 = vld [vmem:[%s1 + $0x38] sm:$0xff]
  %v21 = vld [vmem:[%s1 + $0x40] sm:$0xff]
  %v22 = vld [vmem:[%s1 + $0x48] sm:$0xff]
  %v23 = vld [vmem:[%s1 + $0x50] sm:$0xff]
  %v24 = vld [vmem:[%s1 + $0x58] sm:$0xff]
  %v25 = vld [vmem:[%s1 + $0x60] sm:$0xff]
  %v26 = vld [vmem:[%s1 + $0x68] sm:$0xff]
  %v27 = vld [vmem:[%s1 + $0x70] sm:$0xff]
  %v28 = vld [vmem:[%s1 + $0x78] sm:$0xff]
  %v29 = vld [vmem:[%s1 + $0x80] sm:$0xff]
  %v30 = vld [vmem:[%s1 + $0x88] sm:$0xff]
  %v31 = vld [vmem:[%s1 + $0x90] sm:$0xff]
  %v32 = vld [vmem:[%s1 + $0x98] sm:$0xff]
  %v33 = vld [vmem:[%s1 + $0xa0] sm:$0xff]
  %v34 = vld [vmem:[%s1 + $0xa8] sm:$0xff]
  %v35 = vld [vmem:[%s1 + $0xb0] sm:$0xff]
  %v36 = vld [vmem:[%s1 + $0xb8] sm:$0xff]
  %v37 = vld [vmem:[%s1 + $0xc0] sm:$0xff]
  %v38 = vld [vmem:[%s1 + $0xc8] sm:$0xff]
  %v39 = vld [vmem:[%s1 + $0xd0] sm:$0xff]
  %v40 = vld [vmem:[%s1 + $0xd8] sm:$0xff]
  %v41 = vld [vmem:[%s1 + $0xe0] sm:$0xff]
  %v42 = vld [vmem:[%s1 + $0xe8] sm:$0xff]
  %v43 = vld [vmem:[%s1 + $0xf0] sm:$0xff]
  %v44 = vld [vmem:[%s1 + $0xf8] sm:$0xff]
  %v45 = vld [vmem:[%s1 + $0x100] sm:$0xff]
  %v46 = vld [vmem:[%s1 + $0x108] sm:$0xff]
  %v47 = vld [vmem:[%s1 + $0x110] sm:$0xff]
  %v48 = vld [vmem:[%s1 + $0x118] sm:$0xff]
  %v49 = vld [vmem:[%s1 + $0x120] sm:$0xff]
  %v50 = vld [vmem:[%s1 + $0x128] sm:$0xff]
  %v51 = vld [vmem:[%s1 + $0x130] sm:$0xff]
  %v52 = vld [vmem:[%s1 + $0x138] sm:$0xff]
  %v53 = vld [vmem:[%s1 + $0x140] sm:$0xff]
  %v54 = vld [vmem:[%s1 + $0x148] sm:$0xff]
  %v55 = vld [vmem:[%s1 + $0x150] sm:$0xff]
  %v56 = vld [vmem:[%s1 + $0x158] sm:$0xff]
  %v57 = vld [vmem:[%s1 + $0x160] sm:$0xff]
  %v58 = vld [vmem:[%s1 + $0x168] sm:$0xff]
  %v59 = vld [vmem:[%s1 + $0x170] sm:$0xff]
  %v60 = vld [vmem:[%s1 + $0x178] sm:$0xff]
  %v61 = vld [vmem:[%s1 + $0x180] sm:$0xff]
  %v62 = vld [vmem:[%s1 + $0x188] sm:$0xff]
  %v63 = vld [vmem:[%s1 + $0x190] sm:$0xff]
  %v64 = vld [vmem:[%s1 + $0x198] sm:$0xff]
  %v65 = vld [vmem:[%s1 + $0x1a0] sm:$0xff]
  %v66 = vld [vmem:[%s1 + $0x1a8] sm:$0xff]
  %v67 = vld [vmem:[%s1 + $0x1b0] sm:$0xff]
  %v68 = vld [vmem:[%s1 + $0x1b8] sm:$0xff]
  %v69 = vld [vmem:[%s1 + $0x1c0] sm:$0xff]
  %v70 = vld [vmem:[%s1 + $0x1c8] sm:$0xff]
  %v71 = vld [vmem:[%s1 + $0x1d0] sm:$0xff]
  %v72 = vld [vmem:[%s1 + $0x1d8] sm:$0xff]
  %v73 = vld [vmem:[%s1 + $0x1e0] sm:$0xff]
  %v74 = vld [vmem:[%s1 + $0x1e8] sm:$0xff]
  %v75 = vld [vmem:[%s1 + $0x1f0] sm:$0xff]
  %v76 = vld [vmem:[%s1 + $0x1f8] sm:$0xff]
  %77 = vmatprep.subr.mxu0 %v14
  %78 = vmatpush1.msra.mxu0 %v13
  %79 = vmatprep.subr.mxu0 %v16
  %80 = vmatpush1.msra.mxu0 %v15
  %81 = vmatprep.subr.mxu0 %v18
  %82 = vmatpush1.msra.mxu0 %v17
  %83 = vmatprep.subr.mxu0 %v20
  %84 = vmatpush1.msra.mxu0 %v19
  %85 = vmatprep.subr.mxu0 %v22
  %86 = vmatpush1.msra.mxu0 %v21
  %87 = vmatprep.subr.mxu0 %v24
  %88 = vmatpush1.msra.mxu0 %v23
  %89 = vmatprep.subr.mxu0 %v26
  %90 = vmatpush1.msra.mxu0 %v25
  %91 = vmatprep.subr.mxu0 %v28
  %92 = vmatpush1.msra.mxu0 %v27
  %93 = vmatprep.subr.mxu0 %v30
  %94 = vmatpush1.msra.mxu0 %v29
  %95 = vmatprep.subr.mxu0 %v32
  %96 = vmatpush1.msra.mxu0 %v31
  %97 = vmatprep.subr.mxu0 %v34
  %98 = vmatpush1.msra.mxu0 %v33
  %99 = vmatprep.subr.mxu0 %v36
  %100 = vmatpush1.msra.mxu0 %v35
  %101 = vmatprep.subr.mxu0 %v38
  %102 = vmatpush1.msra.mxu0 %v37
  %103 = vmatprep.subr.mxu0 %v40
  %104 = vmatpush1.msra.mxu0 %v39
  %105 = vmatprep.subr.mxu0 %v42
  %106 = vmatpush1.msra.mxu0 %v41
  %107 = vmatprep.subr.mxu0 %v44
  %108 = vmatpush1.msra.mxu0 %v43
  %109 = vmatprep.subr.mxu0 %v46
  %110 = vmatpush1.msra.mxu0 %v45
  %111 = vmatprep.subr.mxu0 %v48
  %112 = vmatpush1.msra.mxu0 %v47
  %113 = vmatprep.subr.mxu0 %v50
  %114 = vmatpush1.msra.mxu0 %v49
  %115 = vmatprep.subr.mxu0 %v52
  %116 = vmatpush1.msra.mxu0 %v51
  %117 = vmatprep.subr.mxu0 %v54
  %118 = vmatpush1.msra.mxu0 %v53
  %119 = vmatprep.subr.mxu0 %v56
  %120 = vmatpush1.msra.mxu0 %v55
  %121 = vmatprep.subr.mxu0 %v58
  %122 = vmatpush1.msra.mxu0 %v57
  %123 = vmatprep.subr.mxu0 %v60
  %124 = vmatpush1.msra.mxu0 %v59
  %125 = vmatprep.subr.mxu0 %v62
  %126 = vmatpush1.msra.mxu0 %v61
  %127 = vmatprep.subr.mxu0 %v64
  %128 = vmatpush1.msra.mxu0 %v63
  %129 = vmatprep.subr.mxu0 %v66
  %130 = vmatpush1.msra.mxu0 %v65
  %131 = vmatprep.subr.mxu0 %v68
  %132 = vmatpush1.msra.mxu0 %v67
  %133 = vmatprep.subr.mxu0 %v70
  %134 = vmatpush1.msra.mxu0 %v69
  %135 = vmatprep.subr.mxu0 %v72
  %136 = vmatpush1.msra.mxu0 %v71
  %137 = vmatprep.subr.mxu0 %v74
  %138 = vmatpush1.msra.mxu0 %v73
  %139 = vmatprep.subr.mxu0 %v76
  %140 = vmatpush1.msra.mxu0 %v75
  %141 = vmatprep.mubr.f32.mxu0 %v12
  %142 = vmatmul.mubr.f32.gmra.mrb[0].mxu0 %v11
  %v143 = vpop.f32.mrb[0].mxu0
  %v144 = vadd.f32 0.0, %v143
  %v145 = vpop.f32.mrb[0].mxu0
  %v146 = vadd.f32 0.0, %v145
  %147 = vdwg.mxu0
  %148 = vst [vmem:[%s2] sm:$0xff] %v144
  %149 = vst [vmem:[%s2 + $0x8] sm:$0xff] %v146
  // Predicated region
  $region10: #{quantum_tensor_layer.1} parent=0 // pred_check
    _
  $region11: #{quantum_tensor_layer.1} parent=0 // pred_check_branch
    %151 = sbr.rel (0) target = $region13
  $region12: #{quantum_tensor_layer.1} parent=0 // pred_region
    _
  $region13: #{quantum_tensor_layer.1} parent=0 // pred_fallthru
    _
  // Predicated region
  $region14: #{quantum_tensor_layer.1} parent=0 // pred_check
    _
  $region15: #{quantum_tensor_layer.1} parent=0 // pred_check_branch
    %153 = sbr.rel (0) target = $region17
  $region16: #{quantum_tensor_layer.1} parent=0 // pred_region
    _
  $region17: #{quantum_tensor_layer.1} parent=0 // pred_fallthru
    _

</llo_original>
